<compile_context>
chip_gen: v7x
topology: tpu7x:2x2x1
jax: 0.10.0
libtpu: 0.0.40
codegen_flags: <defaults>
</compile_context>

<pallas_src>
import jax
import jax.numpy as jnp
from jax.experimental import pallas as pl
from jax.experimental.pallas import tpu as pltpu

IN_FEATURES = 119
F_PAD = 128          # lane-aligned feature dim
LATENT_DIM = 10
H1 = 64
H2 = 32
EPS = 1e-8
# TODO(synk): flatten_features=4096 belongs to the (unshown) conv variant of the
# AutoEncoder and has no role in the MLP KDDCUP forward path; it is unused here.
# TODO(synk): optional batch-row packing of the narrow (K=32/64) middle layers into
# 128-lane rows (block-diagonal weights) is not applied; only do it after bundle
# dumps confirm XLU slack absorbs the repack.


def _round_up(n, m):
    return ((n + m - 1) // m) * m


def _device_flags():
    """(use_bf16_act, big_vmem): bf16 VPU/EUP path and 128-MiB-VMEM single-TC parts."""
    try:
        kind = jax.devices()[0].device_kind.lower()
    except Exception:
        kind = ""
    old_gen = any(s in kind for s in ("v2", "v3", "v4", "v5"))   # no bf16 VPU/EUP path
    use_bf16_act = not old_gen
    big_vmem = any(s in kind for s in ("v5", "v6"))              # 128 MiB VMEM, 1 TC
    return use_bf16_act, big_vmem


def make_duad_kernel(use_bf16_act):
    act_dtype = jnp.bfloat16 if use_bf16_act else jnp.float32

    def duad_kernel(x_ref,
                    w1_ref, b1_ref, w2_ref, b2_ref,
                    w3c_ref, b3_ref, b34_ref,
                    w5_ref, b5_ref, w6_ref, b6_ref,
                    out_ref):
        x = x_ref[...]                                   # (TB, 128) f32, padded cols = 0
        xb = x.astype(jnp.bfloat16)

        def act(acc_f32, b_ref):
            # tanh layer: bf16 bias-add + tanh on v6e/v7x (bf16 VPU/EUP), f32 on v5e.
            h = jnp.tanh(acc_f32.astype(act_dtype) + b_ref[...].astype(act_dtype))
            return h.astype(jnp.bfloat16)                # bf16 MXU LHS for next layer

        # ---------------- encoder ----------------
        h1 = act(jnp.dot(xb, w1_ref[...], preferred_element_type=jnp.float32), b1_ref)
        h2 = act(jnp.dot(h1, w2_ref[...], preferred_element_type=jnp.float32), b2_ref)

        # ---- fused bottleneck: one matmul yields z_c (cols :10) and the first
        # ---- decoder pre-activation (cols 10:42), since w3c = [w3 | w3@w4].
        fused = jnp.dot(h2, w3c_ref[...], preferred_element_type=jnp.float32)
        z_c = fused[:, :LATENT_DIM] + b3_ref[...]        # f32 output
        d1 = act(fused[:, LATENT_DIM:], b34_ref)         # tanh(h2@(w3@w4) + b3@w4 + b4)

        # ---------------- decoder ----------------
        d2 = act(jnp.dot(d1, w5_ref[...], preferred_element_type=jnp.float32), b5_ref)
        x_out = jnp.dot(d2, w6_ref[...],
                        preferred_element_type=jnp.float32) + b6_ref[...]

        # ---------------- cosine similarity (dim=1, eps=1e-8) ----------------
        # Padded feature columns are zero in both x and x_out -> no contribution.
        dot = jnp.sum(x * x_out, axis=1, keepdims=True)
        nx2 = jnp.sum(x * x, axis=1, keepdims=True)
        ny2 = jnp.sum(x_out * x_out, axis=1, keepdims=True)
        inv = jax.lax.rsqrt(nx2) * jax.lax.rsqrt(ny2)    # avoids nx2*ny2 f32 overflow
        z_r = dot * jnp.minimum(inv, 1.0 / EPS)          # == dot / max(||x||*||y||, eps)

        # ---- partial (masked) stores; pad lanes 11..127 left stale (never read) ----
        out_ref[:, :LATENT_DIM] = z_c
        out_ref[:, LATENT_DIM:LATENT_DIM + 1] = z_r

    return duad_kernel


def init_params(key):
    """Deterministic small-scale Glorot-ish init for the 6 Linear layers (fp32)."""
    dims = [(IN_FEATURES, H1), (H1, H2), (H2, LATENT_DIM),
            (LATENT_DIM, H2), (H2, H1), (H1, IN_FEATURES)]
    params = []
    keys = jax.random.split(key, len(dims))
    for k, (fan_in, fan_out) in zip(keys, dims):
        scale = 1.0 / jnp.sqrt(jnp.float32(fan_in))
        w = jax.random.uniform(k, (fan_in, fan_out), jnp.float32, -scale, scale)
        b = jnp.zeros((1, fan_out), jnp.float32)   # (1, out) for clean 2D broadcast
        params.extend([w, b])
    return params


def duad_forward(x, params):
    B, F = x.shape
    assert F == IN_FEATURES

    use_bf16_act, big_vmem = _device_flags()
    max_tb = 4096 if big_vmem else 2048
    vmem_limit = (64 if big_vmem else 32) * 1024 * 1024

    # Batch tile (multiple of 8). On 2-TC parts (v7x), force >=2 grid steps so the
    # "parallel" batch axis actually shards across both TensorCores.
    if big_vmem:
        TB = min(max_tb, _round_up(B, 8))
    else:
        TB = min(max_tb, _round_up(B, 8), max(8, _round_up(B, 16) // 2))
    B_pad = _round_up(B, TB)
    grid = (B_pad // TB,)

    # ---- pad x to (B_pad, 128) with zero rows / cols ----
    x_p = jnp.zeros((B_pad, F_PAD), jnp.float32).at[:B, :F].set(
        x.astype(jnp.float32))

    # ---- prepare parameters (weights -> bf16 MXU operands, biases stay f32) ----
    w1, b1, w2, b2, w3, b3, w4, b4, w5, b5, w6, b6 = params
    w1p = jnp.zeros((F_PAD, H1), jnp.float32).at[:F, :].set(w1).astype(jnp.bfloat16)
    # Fused bottleneck RHS / bias: one N=42 matmul replaces the w3 and w4 passes.
    w3c = jnp.concatenate([w3, w3 @ w4], axis=1).astype(jnp.bfloat16)   # (32, 42)
    b34 = b3 @ w4 + b4                                                   # (1, 32)
    w6p = jnp.zeros((H1, F_PAD), jnp.float32).at[:, :F].set(w6).astype(jnp.bfloat16)
    b6p = jnp.zeros((1, F_PAD), jnp.float32).at[:, :F].set(b6)
    padded_params = [
        w1p, b1,
        w2.astype(jnp.bfloat16), b2,
        w3c, b3, b34,
        w5.astype(jnp.bfloat16), b5,
        w6p, b6p,
    ]

    # Weights/biases: full-array blocks with constant index_map -> VMEM-resident
    # across grid steps (Pallas skips re-fetch when the block index is unchanged).
    param_specs = [pl.BlockSpec(p.shape, lambda i: (0, 0)) for p in padded_params]

    flops_per_row = 2 * (F_PAD * H1 + H1 * H2 + H2 * (LATENT_DIM + H2)
                         + H2 * H1 + H1 * F_PAD)
    param_bytes = sum(int(p.size) * p.dtype.itemsize for p in padded_params)
    cost = pl.CostEstimate(
        flops=flops_per_row * B_pad,
        transcendentals=(2 * (H1 + H2) + 2) * B_pad,      # tanh layers + 2 rsqrt
        bytes_accessed=2 * B_pad * F_PAD * 4 + param_bytes,
    )

    packed = pl.pallas_call(
        make_duad_kernel(use_bf16_act),
        out_shape=jax.ShapeDtypeStruct((B_pad, F_PAD), jnp.float32),
        grid=grid,
        in_specs=[pl.BlockSpec((TB, F_PAD), lambda i: (i, 0))] + param_specs,
        out_specs=pl.BlockSpec((TB, F_PAD), lambda i: (i, 0)),
        compiler_params=pltpu.CompilerParams(
            dimension_semantics=("parallel",),
            vmem_limit_bytes=vmem_limit,
        ),
        cost_estimate=cost,
    )(x_p, *padded_params)

    z_c = packed[:B, :LATENT_DIM]
    z_r = packed[:B, LATENT_DIM]      # PyTorch CosineSimilarity returns shape [B]
    return z_c, z_r


def _reference_forward(x, params):
    """Pure-JAX fp32 reference for a loose numerical sanity check."""
    w1, b1, w2, b2, w3, b3, w4, b4, w5, b5, w6, b6 = params
    h = jnp.tanh(x @ w1 + b1)
    h = jnp.tanh(h @ w2 + b2)
    z_c = h @ w3 + b3
    d = jnp.tanh(z_c @ w4 + b4)
    d = jnp.tanh(d @ w5 + b5)
    x_out = d @ w6 + b6
    dot = jnp.sum(x * x_out, axis=1)
    nx = jnp.sqrt(jnp.sum(x * x, axis=1))
    ny = jnp.sqrt(jnp.sum(x_out * x_out, axis=1))
    z_r = dot / jnp.maximum(nx * ny, EPS)
    return z_c, z_r


if __name__ == "__main__":
    key = jax.random.PRNGKey(0)
    k_x, k_p = jax.random.split(key)
    params = init_params(k_p)
    fwd = jax.jit(duad_forward)

    ok = True
    for B in (8, 13):   # 13 exercises batch-row padding and the multi-step grid path
        x = jax.random.normal(jax.random.fold_in(k_x, B), (B, IN_FEATURES),
                              dtype=jnp.float32)
        z_c, z_r = fwd(x, params)
        jax.block_until_ready((z_c, z_r))

        assert z_c.shape == (B, LATENT_DIM)
        assert z_r.shape == (B,)

        # Loose check vs fp32 reference (kernel matmuls use bf16 MXU operands).
        z_c_ref, z_r_ref = _reference_forward(x, params)
        ok &= bool(jnp.max(jnp.abs(z_c - z_c_ref)) < 5e-2)
        ok &= bool(jnp.max(jnp.abs(z_r - z_r_ref)) < 5e-2)

    assert ok
    print("KERNEL_OK")
</pallas_src>

<mosaic_0001>
module attributes {stable_mosaic.version = 11 : i64} {
  func.func @duad_kernel(%arg0: i32, %arg1: memref<8x128xf32, #tpu.memory_space<vmem>>, %arg2: memref<128x64xbf16, #tpu.memory_space<vmem>>, %arg3: memref<1x64xf32, #tpu.memory_space<vmem>>, %arg4: memref<64x32xbf16, #tpu.memory_space<vmem>>, %arg5: memref<1x32xf32, #tpu.memory_space<vmem>>, %arg6: memref<32x42xbf16, #tpu.memory_space<vmem>>, %arg7: memref<1x10xf32, #tpu.memory_space<vmem>>, %arg8: memref<1x32xf32, #tpu.memory_space<vmem>>, %arg9: memref<32x64xbf16, #tpu.memory_space<vmem>>, %arg10: memref<1x64xf32, #tpu.memory_space<vmem>>, %arg11: memref<64x128xbf16, #tpu.memory_space<vmem>>, %arg12: memref<1x128xf32, #tpu.memory_space<vmem>>, %arg13: memref<8x128xf32, #tpu.memory_space<vmem>>) attributes {dimension_semantics = [#tpu.dimension_semantics<parallel>], iteration_bounds = array<i64: 1>, scalar_prefetch = 0 : i64, scratch_operands = 0 : i64, tpu.core_type = #tpu.core_type<tc>, window_params = [{transform_indices = @transform_0, window_bounds = array<i64: 8, 128>}, {pipeline_mode = #tpu.pipeline_mode<synchronous>, transform_indices = @transform_1, window_bounds = array<i64: 128, 64>}, {pipeline_mode = #tpu.pipeline_mode<synchronous>, transform_indices = @transform_2, window_bounds = array<i64: 1, 64>}, {pipeline_mode = #tpu.pipeline_mode<synchronous>, transform_indices = @transform_3, window_bounds = array<i64: 64, 32>}, {pipeline_mode = #tpu.pipeline_mode<synchronous>, transform_indices = @transform_4, window_bounds = array<i64: 1, 32>}, {pipeline_mode = #tpu.pipeline_mode<synchronous>, transform_indices = @transform_5, window_bounds = array<i64: 32, 42>}, {pipeline_mode = #tpu.pipeline_mode<synchronous>, transform_indices = @transform_6, window_bounds = array<i64: 1, 10>}, {pipeline_mode = #tpu.pipeline_mode<synchronous>, transform_indices = @transform_7, window_bounds = array<i64: 1, 32>}, {pipeline_mode = #tpu.pipeline_mode<synchronous>, transform_indices = @transform_8, window_bounds = array<i64: 32, 64>}, {pipeline_mode = #tpu.pipeline_mode<synchronous>, transform_indices = @transform_9, window_bounds = array<i64: 1, 64>}, {pipeline_mode = #tpu.pipeline_mode<synchronous>, transform_indices = @transform_10, window_bounds = array<i64: 64, 128>}, {pipeline_mode = #tpu.pipeline_mode<synchronous>, transform_indices = @transform_11, window_bounds = array<i64: 1, 128>}, {transform_indices = @transform_12, window_bounds = array<i64: 8, 128>}]} {
    %c0 = arith.constant 0 : index
    %c0_0 = arith.constant 0 : index
    %0 = vector.load %arg1[%c0, %c0_0] : memref<8x128xf32, #tpu.memory_space<vmem>>, vector<8x128xf32>
    %1 = arith.truncf %0 : vector<8x128xf32> to vector<8x128xbf16>
    %c0_1 = arith.constant 0 : index
    %c0_2 = arith.constant 0 : index
    %2 = vector.load %arg2[%c0_1, %c0_2] : memref<128x64xbf16, #tpu.memory_space<vmem>>, vector<128x64xbf16>
    %cst = arith.constant dense<0.000000e+00> : vector<8x64xf32>
    %3 = tpu.matmul %1, %2, %cst {dimension_numbers = #tpu.dot_dimension_numbers<[1], [0], [0], [1], [0, 0, 1, 1], [], []>} : vector<8x128xbf16>, vector<128x64xbf16>, vector<8x64xf32> -> vector<8x64xf32>
    %4 = arith.truncf %3 : vector<8x64xf32> to vector<8x64xbf16>
    %c0_3 = arith.constant 0 : index
    %c0_4 = arith.constant 0 : index
    %5 = vector.load %arg3[%c0_3, %c0_4] : memref<1x64xf32, #tpu.memory_space<vmem>>, vector<1x64xf32>
    %6 = arith.truncf %5 : vector<1x64xf32> to vector<1x64xbf16>
    %7 = vector.broadcast %6 : vector<1x64xbf16> to vector<8x64xbf16>
    %8 = arith.addf %4, %7 : vector<8x64xbf16>
    %9 = math.tanh %8 : vector<8x64xbf16>
    %c0_5 = arith.constant 0 : index
    %c0_6 = arith.constant 0 : index
    %10 = vector.load %arg4[%c0_5, %c0_6] : memref<64x32xbf16, #tpu.memory_space<vmem>>, vector<64x32xbf16>
    %cst_7 = arith.constant dense<0.000000e+00> : vector<8x32xf32>
    %11 = tpu.matmul %9, %10, %cst_7 {dimension_numbers = #tpu.dot_dimension_numbers<[1], [0], [0], [1], [0, 0, 1, 1], [], []>} : vector<8x64xbf16>, vector<64x32xbf16>, vector<8x32xf32> -> vector<8x32xf32>
    %12 = arith.truncf %11 : vector<8x32xf32> to vector<8x32xbf16>
    %c0_8 = arith.constant 0 : index
    %c0_9 = arith.constant 0 : index
    %13 = vector.load %arg5[%c0_8, %c0_9] : memref<1x32xf32, #tpu.memory_space<vmem>>, vector<1x32xf32>
    %14 = arith.truncf %13 : vector<1x32xf32> to vector<1x32xbf16>
    %15 = vector.broadcast %14 : vector<1x32xbf16> to vector<8x32xbf16>
    %16 = arith.addf %12, %15 : vector<8x32xbf16>
    %17 = math.tanh %16 : vector<8x32xbf16>
    %c0_10 = arith.constant 0 : index
    %c0_11 = arith.constant 0 : index
    %18 = vector.load %arg6[%c0_10, %c0_11] : memref<32x42xbf16, #tpu.memory_space<vmem>>, vector<32x42xbf16>
    %cst_12 = arith.constant dense<0.000000e+00> : vector<8x42xf32>
    %19 = tpu.matmul %17, %18, %cst_12 {dimension_numbers = #tpu.dot_dimension_numbers<[1], [0], [0], [1], [0, 0, 1, 1], [], []>} : vector<8x32xbf16>, vector<32x42xbf16>, vector<8x42xf32> -> vector<8x42xf32>
    %20 = vector.extract_strided_slice %19 {offsets = [0, 0], sizes = [8, 10], strides = [1, 1]} : vector<8x42xf32> to vector<8x10xf32>
    %c0_13 = arith.constant 0 : index
    %c0_14 = arith.constant 0 : index
    %21 = vector.load %arg7[%c0_13, %c0_14] : memref<1x10xf32, #tpu.memory_space<vmem>>, vector<1x10xf32>
    %22 = vector.broadcast %21 : vector<1x10xf32> to vector<8x10xf32>
    %23 = arith.addf %20, %22 : vector<8x10xf32>
    %24 = vector.extract_strided_slice %19 {offsets = [0, 10], sizes = [8, 32], strides = [1, 1]} : vector<8x42xf32> to vector<8x32xf32>
    %25 = arith.truncf %24 : vector<8x32xf32> to vector<8x32xbf16>
    %c0_15 = arith.constant 0 : index
    %c0_16 = arith.constant 0 : index
    %26 = vector.load %arg8[%c0_15, %c0_16] : memref<1x32xf32, #tpu.memory_space<vmem>>, vector<1x32xf32>
    %27 = arith.truncf %26 : vector<1x32xf32> to vector<1x32xbf16>
    %28 = vector.broadcast %27 : vector<1x32xbf16> to vector<8x32xbf16>
    %29 = arith.addf %25, %28 : vector<8x32xbf16>
    %30 = math.tanh %29 : vector<8x32xbf16>
    %c0_17 = arith.constant 0 : index
    %c0_18 = arith.constant 0 : index
    %31 = vector.load %arg9[%c0_17, %c0_18] : memref<32x64xbf16, #tpu.memory_space<vmem>>, vector<32x64xbf16>
    %cst_19 = arith.constant dense<0.000000e+00> : vector<8x64xf32>
    %32 = tpu.matmul %30, %31, %cst_19 {dimension_numbers = #tpu.dot_dimension_numbers<[1], [0], [0], [1], [0, 0, 1, 1], [], []>} : vector<8x32xbf16>, vector<32x64xbf16>, vector<8x64xf32> -> vector<8x64xf32>
    %33 = arith.truncf %32 : vector<8x64xf32> to vector<8x64xbf16>
    %c0_20 = arith.constant 0 : index
    %c0_21 = arith.constant 0 : index
    %34 = vector.load %arg10[%c0_20, %c0_21] : memref<1x64xf32, #tpu.memory_space<vmem>>, vector<1x64xf32>
    %35 = arith.truncf %34 : vector<1x64xf32> to vector<1x64xbf16>
    %36 = vector.broadcast %35 : vector<1x64xbf16> to vector<8x64xbf16>
    %37 = arith.addf %33, %36 : vector<8x64xbf16>
    %38 = math.tanh %37 : vector<8x64xbf16>
    %c0_22 = arith.constant 0 : index
    %c0_23 = arith.constant 0 : index
    %39 = vector.load %arg11[%c0_22, %c0_23] : memref<64x128xbf16, #tpu.memory_space<vmem>>, vector<64x128xbf16>
    %cst_24 = arith.constant dense<0.000000e+00> : vector<8x128xf32>
    %40 = tpu.matmul %38, %39, %cst_24 {dimension_numbers = #tpu.dot_dimension_numbers<[1], [0], [0], [1], [0, 0, 1, 1], [], []>} : vector<8x64xbf16>, vector<64x128xbf16>, vector<8x128xf32> -> vector<8x128xf32>
    %c0_25 = arith.constant 0 : index
    %c0_26 = arith.constant 0 : index
    %41 = vector.load %arg12[%c0_25, %c0_26] : memref<1x128xf32, #tpu.memory_space<vmem>>, vector<1x128xf32>
    %42 = vector.broadcast %41 : vector<1x128xf32> to vector<8x128xf32>
    %43 = arith.addf %40, %42 : vector<8x128xf32>
    %44 = arith.mulf %0, %43 : vector<8x128xf32>
    %cst_27 = arith.constant dense<0.000000e+00> : vector<8xf32>
    %45 = vector.multi_reduction <add>, %44, %cst_27 [1] : vector<8x128xf32> to vector<8xf32>
    %46 = vector.shape_cast %45 : vector<8xf32> to vector<8x1xf32>
    %47 = arith.mulf %0, %0 : vector<8x128xf32>
    %cst_28 = arith.constant dense<0.000000e+00> : vector<8xf32>
    %48 = vector.multi_reduction <add>, %47, %cst_28 [1] : vector<8x128xf32> to vector<8xf32>
    %49 = vector.shape_cast %48 : vector<8xf32> to vector<8x1xf32>
    %50 = arith.mulf %43, %43 : vector<8x128xf32>
    %cst_29 = arith.constant dense<0.000000e+00> : vector<8xf32>
    %51 = vector.multi_reduction <add>, %50, %cst_29 [1] : vector<8x128xf32> to vector<8xf32>
    %52 = vector.shape_cast %51 : vector<8xf32> to vector<8x1xf32>
    %53 = math.rsqrt %49 : vector<8x1xf32>
    %54 = math.rsqrt %52 : vector<8x1xf32>
    %55 = arith.mulf %53, %54 : vector<8x1xf32>
    %cst_30 = arith.constant 1.000000e+08 : f32
    %56 = vector.broadcast %cst_30 : f32 to vector<8x1xf32>
    %57 = arith.minimumf %55, %56 : vector<8x1xf32>
    %58 = arith.mulf %46, %57 : vector<8x1xf32>
    %c0_31 = arith.constant 0 : index
    %c0_32 = arith.constant 0 : index
    %59 = vector.load %arg13[%c0_31, %c0_32] : memref<8x128xf32, #tpu.memory_space<vmem>>, vector<8x10xf32>
    tpu.vector_store %arg13[%c0_31, %c0_32], %23 {strides = array<i32>} : memref<8x128xf32, #tpu.memory_space<vmem>>, vector<8x10xf32>,
    %c0_33 = arith.constant 0 : index
    %c10 = arith.constant 10 : index
    %60 = vector.load %arg13[%c0_33, %c10] : memref<8x128xf32, #tpu.memory_space<vmem>>, vector<8x1xf32>
    tpu.vector_store %arg13[%c0_33, %c10], %58 {strides = array<i32>} : memref<8x128xf32, #tpu.memory_space<vmem>>, vector<8x1xf32>,
    return
  }
  func.func @transform_0(%arg0: i32) -> (i32, i32) {
    %c0_i32 = arith.constant 0 : i32
    %c0_i32_0 = arith.constant 0 : i32
    return %arg0, %c0_i32 : i32, i32
  }
  func.func @transform_1(%arg0: i32) -> (i32, i32) {
    %c0_i32 = arith.constant 0 : i32
    %c0_i32_0 = arith.constant 0 : i32
    %c0_i32_1 = arith.constant 0 : i32
    return %c0_i32, %c0_i32_0 : i32, i32
  }
  func.func @transform_2(%arg0: i32) -> (i32, i32) {
    %c0_i32 = arith.constant 0 : i32
    %c0_i32_0 = arith.constant 0 : i32
    %c0_i32_1 = arith.constant 0 : i32
    return %c0_i32, %c0_i32_0 : i32, i32
  }
  func.func @transform_3(%arg0: i32) -> (i32, i32) {
    %c0_i32 = arith.constant 0 : i32
    %c0_i32_0 = arith.constant 0 : i32
    %c0_i32_1 = arith.constant 0 : i32
    return %c0_i32, %c0_i32_0 : i32, i32
  }
  func.func @transform_4(%arg0: i32) -> (i32, i32) {
    %c0_i32 = arith.constant 0 : i32
    %c0_i32_0 = arith.constant 0 : i32
    %c0_i32_1 = arith.constant 0 : i32
    return %c0_i32, %c0_i32_0 : i32, i32
  }
  func.func @transform_5(%arg0: i32) -> (i32, i32) {
    %c0_i32 = arith.constant 0 : i32
    %c0_i32_0 = arith.constant 0 : i32
    %c0_i32_1 = arith.constant 0 : i32
    return %c0_i32, %c0_i32_0 : i32, i32
  }
  func.func @transform_6(%arg0: i32) -> (i32, i32) {
    %c0_i32 = arith.constant 0 : i32
    %c0_i32_0 = arith.constant 0 : i32
    %c0_i32_1 = arith.constant 0 : i32
    return %c0_i32, %c0_i32_0 : i32, i32
  }
  func.func @transform_7(%arg0: i32) -> (i32, i32) {
    %c0_i32 = arith.constant 0 : i32
    %c0_i32_0 = arith.constant 0 : i32
    %c0_i32_1 = arith.constant 0 : i32
    return %c0_i32, %c0_i32_0 : i32, i32
  }
  func.func @transform_8(%arg0: i32) -> (i32, i32) {
    %c0_i32 = arith.constant 0 : i32
    %c0_i32_0 = arith.constant 0 : i32
    %c0_i32_1 = arith.constant 0 : i32
    return %c0_i32, %c0_i32_0 : i32, i32
  }
  func.func @transform_9(%arg0: i32) -> (i32, i32) {
    %c0_i32 = arith.constant 0 : i32
    %c0_i32_0 = arith.constant 0 : i32
    %c0_i32_1 = arith.constant 0 : i32
    return %c0_i32, %c0_i32_0 : i32, i32
  }
  func.func @transform_10(%arg0: i32) -> (i32, i32) {
    %c0_i32 = arith.constant 0 : i32
    %c0_i32_0 = arith.constant 0 : i32
    %c0_i32_1 = arith.constant 0 : i32
    return %c0_i32, %c0_i32_0 : i32, i32
  }
  func.func @transform_11(%arg0: i32) -> (i32, i32) {
    %c0_i32 = arith.constant 0 : i32
    %c0_i32_0 = arith.constant 0 : i32
    %c0_i32_1 = arith.constant 0 : i32
    return %c0_i32, %c0_i32_0 : i32, i32
  }
  func.func @transform_12(%arg0: i32) -> (i32, i32) {
    %c0_i32 = arith.constant 0 : i32
    %c0_i32_0 = arith.constant 0 : i32
    return %arg0, %c0_i32 : i32, i32
  }
}

</mosaic_0001>

<llo_original>
// kernel: duad_forward.1
$region0: #{duad_forward.1}
  #allocation0 [shape = 'u32[]', space=smem, size = 0x4, offset = 0x4, fixed_abs, tag = 'smem constant byte address 0x4 - core index']
  #allocation1 [shape = 'u32[144,128]{1,0:T(1,128)}', space=vmem, size = 0x12000, scoped, tag = 'internal scratch']
  %s0 = inlined_call_operand.vmem [shape: f32[8,128], index: 0, kind: input, shape index: {}]
  %s1 = inlined_call_operand.vmem [shape: bf16[128,64], index: 1, kind: input, shape index: {}]
  %s2 = inlined_call_operand.vmem [shape: f32[1,64], index: 2, kind: input, shape index: {}]
  %s3 = inlined_call_operand.vmem [shape: bf16[64,32], index: 3, kind: input, shape index: {}]
  %s4 = inlined_call_operand.vmem [shape: f32[1,32], index: 4, kind: input, shape index: {}]
  %s5 = inlined_call_operand.vmem [shape: bf16[32,42], index: 5, kind: input, shape index: {}]
  %s6 = inlined_call_operand.vmem [shape: f32[1,10], index: 6, kind: input, shape index: {}]
  %s7 = inlined_call_operand.vmem [shape: f32[1,32], index: 7, kind: input, shape index: {}]
  %s8 = inlined_call_operand.vmem [shape: bf16[32,64], index: 8, kind: input, shape index: {}]
  %s9 = inlined_call_operand.vmem [shape: f32[1,64], index: 9, kind: input, shape index: {}]
  %s10 = inlined_call_operand.vmem [shape: bf16[64,128], index: 10, kind: input, shape index: {}]
  %s11 = inlined_call_operand.vmem [shape: f32[1,128], index: 11, kind: input, shape index: {}]
  %s12 = inlined_call_operand.vmem [shape: f32[8,128], index: 12, kind: output, shape index: {}]
  %s13 = sld [smem:[#allocation0]]
  $region58: #{duad_forward.1} parent=0
    _
  %s15 = ssub.s32 1, %s13
  %s16 = scalar_select 0, %s15, %s13
  // Predicated region
  $region2: #{duad_forward.1} parent=0 // pred_check
    _
  $region3: #{duad_forward.1} parent=0 // pred_check_branch
    %18 = sbr.rel (0) target = $region5
  $region4: #{duad_forward.1} parent=0 // pred_region
    _
  $region5: #{duad_forward.1} parent=0 // pred_fallthru
    _
  // Predicated region
  $region6: #{duad_forward.1} parent=0 // pred_check
    _
  $region7: #{duad_forward.1} parent=0 // pred_check_branch
    %20 = sbr.rel (0) target = $region9
  $region8: #{duad_forward.1} parent=0 // pred_region
    _
  $region9: #{duad_forward.1} parent=0 // pred_fallthru
    _
  // Predicated region
  $region10: #{duad_forward.1} parent=0 // pred_check
    _
  $region11: #{duad_forward.1} parent=0 // pred_check_branch
    %22 = sbr.rel (0) target = $region13
  $region12: #{duad_forward.1} parent=0 // pred_region
    _
  $region13: #{duad_forward.1} parent=0 // pred_fallthru
    _
  // Predicated region
  $region14: #{duad_forward.1} parent=0 // pred_check
    _
  $region15: #{duad_forward.1} parent=0 // pred_check_branch
    %24 = sbr.rel (0) target = $region17
  $region16: #{duad_forward.1} parent=0 // pred_region
    _
  $region17: #{duad_forward.1} parent=0 // pred_fallthru
    _
  // Predicated region
  $region18: #{duad_forward.1} parent=0 // pred_check
    _
  $region19: #{duad_forward.1} parent=0 // pred_check_branch
    %26 = sbr.rel (0) target = $region21
  $region20: #{duad_forward.1} parent=0 // pred_region
    _
  $region21: #{duad_forward.1} parent=0 // pred_fallthru
    _
  // Predicated region
  $region22: #{duad_forward.1} parent=0 // pred_check
    _
  $region23: #{duad_forward.1} parent=0 // pred_check_branch
    %28 = sbr.rel (0) target = $region25
  $region24: #{duad_forward.1} parent=0 // pred_region
    _
  $region25: #{duad_forward.1} parent=0 // pred_fallthru
    _
  // Predicated region
  $region26: #{duad_forward.1} parent=0 // pred_check
    _
  $region27: #{duad_forward.1} parent=0 // pred_check_branch
    %30 = sbr.rel (0) target = $region29
  $region28: #{duad_forward.1} parent=0 // pred_region
    _
  $region29: #{duad_forward.1} parent=0 // pred_fallthru
    _
  // Predicated region
  $region30: #{duad_forward.1} parent=0 // pred_check
    _
  $region31: #{duad_forward.1} parent=0 // pred_check_branch
    %32 = sbr.rel (0) target = $region33
  $region32: #{duad_forward.1} parent=0 // pred_region
    _
  $region33: #{duad_forward.1} parent=0 // pred_fallthru
    _
  // Predicated region
  $region34: #{duad_forward.1} parent=0 // pred_check
    _
  $region35: #{duad_forward.1} parent=0 // pred_check_branch
    %34 = sbr.rel (0) target = $region37
  $region36: #{duad_forward.1} parent=0 // pred_region
    _
  $region37: #{duad_forward.1} parent=0 // pred_fallthru
    _
  // Predicated region
  $region38: #{duad_forward.1} parent=0 // pred_check
    _
  $region39: #{duad_forward.1} parent=0 // pred_check_branch
    %36 = sbr.rel (0) target = $region41
  $region40: #{duad_forward.1} parent=0 // pred_region
    _
  $region41: #{duad_forward.1} parent=0 // pred_fallthru
    _
  // Predicated region
  $region42: #{duad_forward.1} parent=0 // pred_check
    _
  $region43: #{duad_forward.1} parent=0 // pred_check_branch
    %38 = sbr.rel (0) target = $region45
  $region44: #{duad_forward.1} parent=0 // pred_region
    _
  $region45: #{duad_forward.1} parent=0 // pred_fallthru
    _
  // Predicated region
  $region46: #{duad_forward.1} parent=0 // pred_check
    _
  $region47: #{duad_forward.1} parent=0 // pred_check_branch
    %40 = sbr.rel (0) target = $region49
  $region48: #{duad_forward.1} parent=0 // pred_region
    _
  $region49: #{duad_forward.1} parent=0 // pred_fallthru
    _
  %v42 = vld [vmem:[%s0] sm:$0xff]
  %v43 = vpack.c.bf16 %v42, %v42
  %v44 = vld [vmem:[%s1] sm:$0xf]
  %v45 = vld [vmem:[%s1 + $0x4] sm:$0xf]
  %v46 = vld [vmem:[%s1 + $0x8] sm:$0xf]
  %v47 = vld [vmem:[%s1 + $0xc] sm:$0xf]
  %v48 = vld [vmem:[%s1 + $0x10] sm:$0xf]
  %v49 = vld [vmem:[%s1 + $0x14] sm:$0xf]
  %v50 = vld [vmem:[%s1 + $0x18] sm:$0xf]
  %v51 = vld [vmem:[%s1 + $0x1c] sm:$0xf]
  %v52 = vld [vmem:[%s1 + $0x20] sm:$0xf]
  %v53 = vld [vmem:[%s1 + $0x24] sm:$0xf]
  %v54 = vld [vmem:[%s1 + $0x28] sm:$0xf]
  %v55 = vld [vmem:[%s1 + $0x2c] sm:$0xf]
  %v56 = vld [vmem:[%s1 + $0x30] sm:$0xf]
  %v57 = vld [vmem:[%s1 + $0x34] sm:$0xf]
  %v58 = vld [vmem:[%s1 + $0x38] sm:$0xf]
  %v59 = vld [vmem:[%s1 + $0x3c] sm:$0xf]
  %v76 = vunpack.c.l.b16 %v44
  %v77 = vunpack.c.l.b16 %v45
  %v78 = vunpack.c.l.b16 %v46
  %v79 = vunpack.c.l.b16 %v47
  %v80 = vunpack.c.l.b16 %v48
  %v81 = vunpack.c.l.b16 %v49
  %v82 = vunpack.c.l.b16 %v50
  %v83 = vunpack.c.l.b16 %v51
  %v84 = vunpack.c.l.b16 %v52
  %v85 = vunpack.c.l.b16 %v53
  %v86 = vunpack.c.l.b16 %v54
  %v87 = vunpack.c.l.b16 %v55
  %v88 = vunpack.c.l.b16 %v56
  %v89 = vunpack.c.l.b16 %v57
  %v90 = vunpack.c.l.b16 %v58
  %v91 = vunpack.c.l.b16 %v59
  %v92 = vpack.c.b16 %v77, %v76
  %v93 = vpack.c.b16 %v79, %v78
  %v94 = vpack.c.b16 %v81, %v80
  %v95 = vpack.c.b16 %v83, %v82
  %v96 = vpack.c.b16 %v85, %v84
  %v97 = vpack.c.b16 %v87, %v86
  %v98 = vpack.c.b16 %v89, %v88
  %v99 = vpack.c.b16 %v91, %v90
  %108 = vmatprep.subr.bf16.mxu0 0
  %109 = vmatpush1.bf16.msra.mxu0 %v92
  %110 = vmatprep.subr.bf16.mxu0 0
  %111 = vmatpush1.bf16.msra.mxu0 %v93
  %112 = vmatprep.subr.bf16.mxu0 0
  %113 = vmatpush1.bf16.msra.mxu0 %v94
  %114 = vmatprep.subr.bf16.mxu0 0
  %115 = vmatpush1.bf16.msra.mxu0 %v95
  %116 = vmatprep.subr.bf16.mxu0 0
  %117 = vmatpush1.bf16.msra.mxu0 %v96
  %118 = vmatprep.subr.bf16.mxu0 0
  %119 = vmatpush1.bf16.msra.mxu0 %v97
  %120 = vmatprep.subr.bf16.mxu0 0
  %121 = vmatpush1.bf16.msra.mxu0 %v98
  %122 = vmatprep.subr.bf16.mxu0 0
  %123 = vmatpush1.bf16.msra.mxu0 %v99
  %124 = vmatprep.subr.bf16.mxu0 0
  %125 = vmatpush1.bf16.msra.mxu0 0
  %126 = vmatprep.subr.bf16.mxu0 0
  %127 = vmatpush1.bf16.msra.mxu0 0
  %128 = vmatprep.subr.bf16.mxu0 0
  %129 = vmatpush1.bf16.msra.mxu0 0
  %130 = vmatprep.subr.bf16.mxu0 0
  %131 = vmatpush1.bf16.msra.mxu0 0
  %132 = vmatprep.subr.bf16.mxu0 0
  %133 = vmatpush1.bf16.msra.mxu0 0
  %134 = vmatprep.subr.bf16.mxu0 0
  %135 = vmatpush1.bf16.msra.mxu0 0
  %136 = vmatprep.subr.bf16.mxu0 0
  %137 = vmatpush1.bf16.msra.mxu0 0
  %138 = vmatprep.subr.bf16.mxu0 0
  %139 = vmatpush1.bf16.msra.mxu0 0
  %140 = vmatprep.mubr.bf16.mxu0 0
  %141 = vmatmul.mubr.bf16.gmra.mrb[0].mxu0 %v43
  %v142 = vpop.f32.mrb[0].mxu0
  %v143 = vadd.f32 0.0, %v142
  %v144 = vpop.f32.mrb[0].mxu0
  %v145 = vpop.f32.mrb[0].mxu0
  %v146 = vpop.f32.mrb[0].mxu0
  %147 = vdwg.mxu0
  %v148 = vpack.c.bf16 %v143, %v143
  %v149 = vld [vmem:[%s2] sm:$0x1]
  %v150 = vpack.c.bf16 %v149, %v149
  %v152 = vpack.i.b16 %v150, %v150
  %v154 = vlaneseq
  %v155 = vshrl.u32 %v154, 7
  %v156 = vsub.s32 0, %v155
  %v157 = vrot.slane %v152, %v156
  %v158 = vadd.bf16 %v148, %v157
  %v159 = vtanh.bf16.pop %v158
  %v160 = vld [vmem:[%s3] sm:$0xf]
  %v161 = vld [vmem:[%s3 + $0x4] sm:$0xf]
  %v162 = vld [vmem:[%s3 + $0x8] sm:$0xf]
  %v163 = vld [vmem:[%s3 + $0xc] sm:$0xf]
  %v164 = vld [vmem:[%s3 + $0x10] sm:$0xf]
  %v165 = vld [vmem:[%s3 + $0x14] sm:$0xf]
  %v166 = vld [vmem:[%s3 + $0x18] sm:$0xf]
  %v167 = vld [vmem:[%s3 + $0x1c] sm:$0xf]
  %v176 = vunpack.c.l.b16 %v160
  %v177 = vunpack.c.l.b16 %v161
  %v178 = vunpack.c.l.b16 %v162
  %v179 = vunpack.c.l.b16 %v163
  %v180 = vunpack.c.l.b16 %v164
  %v181 = vunpack.c.l.b16 %v165
  %v182 = vunpack.c.l.b16 %v166
  %v183 = vunpack.c.l.b16 %v167
  %v184 = vpack.c.b16 %v177, %v176
  %v185 = vpack.c.b16 %v179, %v178
  %v186 = vpack.c.b16 %v181, %v180
  %v187 = vpack.c.b16 %v183, %v182
  %vm192 = vcmask 523264
  %v194 = vsel %vm192, %v159, 0
  %196 = vmatprep.subr.bf16.mxu0 0
  %197 = vmatpush1.bf16.msra.mxu0 %v184
  %198 = vmatprep.subr.bf16.mxu0 0
  %199 = vmatpush1.bf16.msra.mxu0 %v185
  %200 = vmatprep.subr.bf16.mxu0 0
  %201 = vmatpush1.bf16.msra.mxu0 %v186
  %202 = vmatprep.subr.bf16.mxu0 0
  %203 = vmatpush1.bf16.msra.mxu0 %v187
  %204 = vmatprep.subr.bf16.mxu0 0
  %205 = vmatpush1.bf16.msra.mxu0 0
  %206 = vmatprep.subr.bf16.mxu0 0
  %207 = vmatpush1.bf16.msra.mxu0 0
  %208 = vmatprep.subr.bf16.mxu0 0
  %209 = vmatpush1.bf16.msra.mxu0 0
  %210 = vmatprep.subr.bf16.mxu0 0
  %211 = vmatpush1.bf16.msra.mxu0 0
  %212 = vmatprep.subr.bf16.mxu0 0
  %213 = vmatpush1.bf16.msra.mxu0 0
  %214 = vmatprep.subr.bf16.mxu0 0
  %215 = vmatpush1.bf16.msra.mxu0 0
  %216 = vmatprep.subr.bf16.mxu0 0
  %217 = vmatpush1.bf16.msra.mxu0 0
  %218 = vmatprep.subr.bf16.mxu0 0
  %219 = vmatpush1.bf16.msra.mxu0 0
  %220 = vmatprep.subr.bf16.mxu0 0
  %221 = vmatpush1.bf16.msra.mxu0 0
  %222 = vmatprep.subr.bf16.mxu0 0
  %223 = vmatpush1.bf16.msra.mxu0 0
  %224 = vmatprep.subr.bf16.mxu0 0
  %225 = vmatpush1.bf16.msra.mxu0 0
  %226 = vmatprep.subr.bf16.mxu0 0
  %227 = vmatpush1.bf16.msra.mxu0 0
  %228 = vmatprep.mubr.bf16.mxu0 0
  %229 = vmatmul.mubr.bf16.gmra.mrb[0].mxu0 %v194
  %v230 = vpop.f32.mrb[0].mxu0
  %v231 = vadd.f32 0.0, %v230
  %v232 = vpop.f32.mrb[0].mxu0
  %v233 = vpop.f32.mrb[0].mxu0
  %v234 = vpop.f32.mrb[0].mxu0
  %235 = vdwg.mxu0
  %v236 = vpack.c.bf16 %v231, %v231
  %v237 = vld [vmem:[%s4] sm:$0x1]
  %v238 = vpack.c.bf16 %v237, %v237
  %v240 = vpack.i.b16 %v238, %v238
  %v242 = vlaneseq
  %v243 = vshrl.u32 %v242, 7
  %v244 = vsub.s32 0, %v243
  %v245 = vrot.slane %v240, %v244
  %v246 = vadd.bf16 %v236, %v245
  %v247 = vtanh.bf16.pop %v246
  %v248 = vld [vmem:[%s5] sm:$0xf]
  %v249 = vld [vmem:[%s5 + $0x4] sm:$0xf]
  %v250 = vld [vmem:[%s5 + $0x8] sm:$0xf]
  %v251 = vld [vmem:[%s5 + $0xc] sm:$0xf]
  %v256 = vunpack.c.l.b16 %v248
  %v257 = vunpack.c.l.b16 %v249
  %v258 = vunpack.c.l.b16 %v250
  %v259 = vunpack.c.l.b16 %v251
  %v260 = vpack.c.b16 %v257, %v256
  %v261 = vpack.c.b16 %v259, %v258
  %vm264 = vcmask 261120
  %v266 = vsel %vm264, %v247, 0
  %268 = vmatprep.subr.bf16.mxu0 0
  %269 = vmatpush1.bf16.msra.mxu0 %v260
  %270 = vmatprep.subr.bf16.mxu0 0
  %271 = vmatpush1.bf16.msra.mxu0 %v261
  %272 = vmatprep.subr.bf16.mxu0 0
  %273 = vmatpush1.bf16.msra.mxu0 0
  %274 = vmatprep.subr.bf16.mxu0 0
  %275 = vmatpush1.bf16.msra.mxu0 0
  %276 = vmatprep.subr.bf16.mxu0 0
  %277 = vmatpush1.bf16.msra.mxu0 0
  %278 = vmatprep.subr.bf16.mxu0 0
  %279 = vmatpush1.bf16.msra.mxu0 0
  %280 = vmatprep.subr.bf16.mxu0 0
  %281 = vmatpush1.bf16.msra.mxu0 0
  %282 = vmatprep.subr.bf16.mxu0 0
  %283 = vmatpush1.bf16.msra.mxu0 0
  %284 = vmatprep.subr.bf16.mxu0 0
  %285 = vmatpush1.bf16.msra.mxu0 0
  %286 = vmatprep.subr.bf16.mxu0 0
  %287 = vmatpush1.bf16.msra.mxu0 0
  %288 = vmatprep.subr.bf16.mxu0 0
  %289 = vmatpush1.bf16.msra.mxu0 0
  %290 = vmatprep.subr.bf16.mxu0 0
  %291 = vmatpush1.bf16.msra.mxu0 0
  %292 = vmatprep.subr.bf16.mxu0 0
  %293 = vmatpush1.bf16.msra.mxu0 0
  %294 = vmatprep.subr.bf16.mxu0 0
  %295 = vmatpush1.bf16.msra.mxu0 0
  %296 = vmatprep.subr.bf16.mxu0 0
  %297 = vmatpush1.bf16.msra.mxu0 0
  %298 = vmatprep.subr.bf16.mxu0 0
  %299 = vmatpush1.bf16.msra.mxu0 0
  %300 = vmatprep.mubr.bf16.mxu0 0
  %301 = vmatmul.mubr.bf16.gmra.mrb[0].mxu0 %v266
  %v302 = vpop.f32.mrb[0].mxu0
  %v303 = vadd.f32 0.0, %v302
  %v304 = vpop.f32.mrb[0].mxu0
  %v305 = vpop.f32.mrb[0].mxu0
  %v306 = vpop.f32.mrb[0].mxu0
  %307 = vdwg.mxu0
  %v308 = vld [vmem:[%s6] sm:$0x1]
  %v310 = vlaneseq
  %v311 = vshrl.u32 %v310, 7
  %v312 = vsub.s32 0, %v311
  %v313 = vrot.slane %v308, %v312
  %v315 = vadd.f32 %v303, %v313
  %v316 = vpack.c.bf16 %v303, %v303
  %v317 = vld [vmem:[%s7] sm:$0x1]
  %v318 = vpack.c.bf16 %v317, %v317
  %v320 = vpack.i.b16 %v318, %v318
  %v322 = vlaneseq
  %v323 = vshrl.u32 %v322, 7
  %v324 = vsub.s32 0, %v323
  %v325 = vrot.slane %v320, %v324
  %327 = vrot.lane.b32.xlu0 %v325, 10
  %v328 = vpop.permute.xlu0 %327
  %v330 = vadd.bf16 %v316, %v328
  %v331 = vtanh.bf16.pop %v330
  %v332 = vld [vmem:[%s8] sm:$0xf]
  %v333 = vld [vmem:[%s8 + $0x4] sm:$0xf]
  %v334 = vld [vmem:[%s8 + $0x8] sm:$0xf]
  %v335 = vld [vmem:[%s8 + $0xc] sm:$0xf]
  %337 = vrot.lane.b32.xlu0 %v331, 118
  %v338 = vpop.permute.xlu0 %337
  %v343 = vunpack.c.l.b16 %v332
  %v344 = vunpack.c.l.b16 %v333
  %v345 = vunpack.c.l.b16 %v334
  %v346 = vunpack.c.l.b16 %v335
  %v347 = vpack.c.b16 %v344, %v343
  %v348 = vpack.c.b16 %v346, %v345
  %v352 = vsel %vm264, %v338, 0
  %354 = vmatprep.subr.bf16.mxu0 0
  %355 = vmatpush1.bf16.msra.mxu0 %v347
  %356 = vmatprep.subr.bf16.mxu0 0
  %357 = vmatpush1.bf16.msra.mxu0 %v348
  %358 = vmatprep.subr.bf16.mxu0 0
  %359 = vmatpush1.bf16.msra.mxu0 0
  %360 = vmatprep.subr.bf16.mxu0 0
  %361 = vmatpush1.bf16.msra.mxu0 0
  %362 = vmatprep.subr.bf16.mxu0 0
  %363 = vmatpush1.bf16.msra.mxu0 0
  %364 = vmatprep.subr.bf16.mxu0 0
  %365 = vmatpush1.bf16.msra.mxu0 0
  %366 = vmatprep.subr.bf16.mxu0 0
  %367 = vmatpush1.bf16.msra.mxu0 0
  %368 = vmatprep.subr.bf16.mxu0 0
  %369 = vmatpush1.bf16.msra.mxu0 0
  %370 = vmatprep.subr.bf16.mxu0 0
  %371 = vmatpush1.bf16.msra.mxu0 0
  %372 = vmatprep.subr.bf16.mxu0 0
  %373 = vmatpush1.bf16.msra.mxu0 0
  %374 = vmatprep.subr.bf16.mxu0 0
  %375 = vmatpush1.bf16.msra.mxu0 0
  %376 = vmatprep.subr.bf16.mxu0 0
  %377 = vmatpush1.bf16.msra.mxu0 0
  %378 = vmatprep.subr.bf16.mxu0 0
  %379 = vmatpush1.bf16.msra.mxu0 0
  %380 = vmatprep.subr.bf16.mxu0 0
  %381 = vmatpush1.bf16.msra.mxu0 0
  %382 = vmatprep.subr.bf16.mxu0 0
  %383 = vmatpush1.bf16.msra.mxu0 0
  %384 = vmatprep.subr.bf16.mxu0 0
  %385 = vmatpush1.bf16.msra.mxu0 0
  %386 = vmatprep.mubr.bf16.mxu0 0
  %387 = vmatmul.mubr.bf16.gmra.mrb[0].mxu0 %v352
  %v388 = vpop.f32.mrb[0].mxu0
  %v389 = vadd.f32 0.0, %v388
  %v390 = vpop.f32.mrb[0].mxu0
  %v391 = vpop.f32.mrb[0].mxu0
  %v392 = vpop.f32.mrb[0].mxu0
  %393 = vdwg.mxu0
  %v394 = vpack.c.bf16 %v389, %v389
  %v395 = vld [vmem:[%s9] sm:$0x1]
  %v396 = vpack.c.bf16 %v395, %v395
  %v398 = vpack.i.b16 %v396, %v396
  %v400 = vlaneseq
  %v401 = vshrl.u32 %v400, 7
  %v402 = vsub.s32 0, %v401
  %v403 = vrot.slane %v398, %v402
  %v404 = vadd.bf16 %v394, %v403
  %v405 = vtanh.bf16.pop %v404
  %v406 = vld [vmem:[%s10] sm:$0xf]
  %v407 = vld [vmem:[%s10 + $0x4] sm:$0xf]
  %v408 = vld [vmem:[%s10 + $0x8] sm:$0xf]
  %v409 = vld [vmem:[%s10 + $0xc] sm:$0xf]
  %v410 = vld [vmem:[%s10 + $0x10] sm:$0xf]
  %v411 = vld [vmem:[%s10 + $0x14] sm:$0xf]
  %v412 = vld [vmem:[%s10 + $0x18] sm:$0xf]
  %v413 = vld [vmem:[%s10 + $0x1c] sm:$0xf]
  %v414 = vld [vmem:[%s11] sm:$0x1]
  %v416 = vlaneseq
  %v417 = vshrl.u32 %v416, 7
  %v418 = vsub.s32 0, %v417
  %v419 = vrot.slane %v414, %v418
  %v429 = vunpack.c.l.b16 %v406
  %v430 = vunpack.c.l.b16 %v407
  %v431 = vunpack.c.l.b16 %v408
  %v432 = vunpack.c.l.b16 %v409
  %v433 = vunpack.c.l.b16 %v410
  %v434 = vunpack.c.l.b16 %v411
  %v435 = vunpack.c.l.b16 %v412
  %v436 = vunpack.c.l.b16 %v413
  %v437 = vpack.c.b16 %v430, %v429
  %v438 = vpack.c.b16 %v432, %v431
  %v439 = vpack.c.b16 %v434, %v433
  %v440 = vpack.c.b16 %v436, %v435
  %v446 = vsel %vm192, %v405, 0
  %448 = vmatprep.subr.bf16.mxu0 0
  %449 = vmatpush1.bf16.msra.mxu0 %v437
  %450 = vmatprep.subr.bf16.mxu0 0
  %451 = vmatpush1.bf16.msra.mxu0 %v438
  %452 = vmatprep.subr.bf16.mxu0 0
  %453 = vmatpush1.bf16.msra.mxu0 %v439
  %454 = vmatprep.subr.bf16.mxu0 0
  %455 = vmatpush1.bf16.msra.mxu0 %v440
  %456 = vmatprep.subr.bf16.mxu0 0
  %457 = vmatpush1.bf16.msra.mxu0 0
  %458 = vmatprep.subr.bf16.mxu0 0
  %459 = vmatpush1.bf16.msra.mxu0 0
  %460 = vmatprep.subr.bf16.mxu0 0
  %461 = vmatpush1.bf16.msra.mxu0 0
  %462 = vmatprep.subr.bf16.mxu0 0
  %463 = vmatpush1.bf16.msra.mxu0 0
  %464 = vmatprep.subr.bf16.mxu0 0
  %465 = vmatpush1.bf16.msra.mxu0 0
  %466 = vmatprep.subr.bf16.mxu0 0
  %467 = vmatpush1.bf16.msra.mxu0 0
  %468 = vmatprep.subr.bf16.mxu0 0
  %469 = vmatpush1.bf16.msra.mxu0 0
  %470 = vmatprep.subr.bf16.mxu0 0
  %471 = vmatpush1.bf16.msra.mxu0 0
  %472 = vmatprep.subr.bf16.mxu0 0
  %473 = vmatpush1.bf16.msra.mxu0 0
  %474 = vmatprep.subr.bf16.mxu0 0
  %475 = vmatpush1.bf16.msra.mxu0 0
  %476 = vmatprep.subr.bf16.mxu0 0
  %477 = vmatpush1.bf16.msra.mxu0 0
  %478 = vmatprep.subr.bf16.mxu0 0
  %479 = vmatpush1.bf16.msra.mxu0 0
  %480 = vmatprep.mubr.bf16.mxu0 0
  %481 = vmatmul.mubr.bf16.gmra.mrb[0].mxu0 %v446
  %v482 = vpop.f32.mrb[0].mxu0
  %v483 = vadd.f32 %v419, %v482
  %v484 = vpop.f32.mrb[0].mxu0
  %v485 = vpop.f32.mrb[0].mxu0
  %v486 = vpop.f32.mrb[0].mxu0
  %487 = vdwg.mxu0
  %v488 = vmul.f32 %v42, %v483
  %489 = vadd.xlane.f32.xlu0 %v488
  %v490 = vpop.xlane.xlu0 %489
  %v491 = vmul.f32 %v42, %v42
  %492 = vadd.xlane.f32.xlu0 %v491
  %v493 = vpop.xlane.xlu0 %492
  %v494 = vmul.f32 %v483, %v483
  %495 = vadd.xlane.f32.xlu0 %v494
  %v496 = vpop.xlane.xlu0 %495
  %v497 = vrsqrt.pop %v493
  %v498 = vrsqrt.pop %v496
  %v499 = vmul.f32 %v497, %v498
  %v500 = vmin.f32 %v499, 1e+08
  %v501 = vmul.f32 %v490, %v500
  %vm502 = vcmask 80896
  %503 = vst.msk [vmem:[%s12] sm:$0xff] %vm502, %v315
  %vm504 = vcmask 89168
  %505 = vst.msk [vmem:[%s12] sm:$0xff] %vm504, %v501
  // Predicated region
  $region50: #{duad_forward.1} parent=0 // pred_check
    _
  $region51: #{duad_forward.1} parent=0 // pred_check_branch
    %507 = sbr.rel (0) target = $region53
  $region52: #{duad_forward.1} parent=0 // pred_region
    _
  $region53: #{duad_forward.1} parent=0 // pred_fallthru
    _
  // Predicated region
  $region54: #{duad_forward.1} parent=0 // pred_check
    _
  $region55: #{duad_forward.1} parent=0 // pred_check_branch
    %509 = sbr.rel (0) target = $region57
  $region56: #{duad_forward.1} parent=0 // pred_region
    _
  $region57: #{duad_forward.1} parent=0 // pred_fallthru
    _

</llo_original>
